<compile_context>
chip_gen: v7x
topology: tpu7x:2x2x1
jax: 0.10.0
libtpu: 0.0.40
codegen_flags: <defaults>
</compile_context>

<pallas_src>
import functools

import jax
import jax.numpy as jnp
from jax.experimental import pallas as pl
from jax.experimental.pallas import tpu as pltpu


def _ls_ce_kernel(x_ref, t_ref, out_ref, *, confidence, smooth_over_c):
    """Per-tile label-smoothing CE, accumulated into the resident output block.

    x_ref:   (1, C, TS, 128) logits tile (f32 or bf16)
    t_ref:   (1, TS, 128) int32 target tile
    out_ref: (1, 1, TS, 128) f32 per-lane partial losses (resident across j)
    """
    j = pl.program_id(2)

    @pl.when(j == 0)
    def _():
        out_ref[...] = jnp.zeros_like(out_ref)

    x = x_ref[0]                                # (C, TS, 128), input dtype
    t = t_ref[0]                                # (TS, 128) int32

    # TODO(synk): on v6e/v7x the cmp/select could stay in bf16 (2 elems/lane);
    # kept in f32 here for accuracy/robustness across generations (v5e has no
    # bf16 VALU).
    xf = x.astype(jnp.float32)                  # (C, TS, 128)

    # logsumexp over the class (leading) axis — pure VALU cross-vreg reduces.
    mf = jnp.max(xf, axis=0)                                        # (TS, 128)
    lse = jnp.log(jnp.sum(jnp.exp(xf - mf[None]), axis=0)) + mf     # (TS, 128)

    # sum_C x  and  x[target]  via select+sum (no per-element weight multiply).
    sum_x = jnp.sum(xf, axis=0)                                     # (TS, 128)
    cls = jax.lax.broadcasted_iota(jnp.int32, x.shape, 0)           # (C, TS, 128)
    x_t = jnp.sum(jnp.where(cls == t[None], xf, 0.0), axis=0)       # (TS, 128)

    # TODO(synk): for C >~ 128 the class reductions could be offloaded to the
    # idle MXU via a (1,C) ones-vector matmul.
    out_ref[0, 0] += lse - confidence * x_t - smooth_over_c * sum_x


def _vmem_capacity_bytes():
    try:
        return int(pltpu.get_tpu_info().vmem_capacity_bytes)
    except Exception:
        return 64 << 20          # conservative fallback: v7x physical VMEM / TC


def _pick_tile_s(s, c, itemsize, budget_bytes):
    """Largest spatial (sublane) tile TS such that TS divides s, TS is a
    multiple of 8 (or the full extent), and the (C, TS, 128) logits tile fits
    the byte budget."""
    bytes_per_row = c * 128 * itemsize
    cands = [ts for ts in range(8, s, 8) if s % ts == 0]
    cands.append(s)                          # full extent is always layout-legal
    within = [ts for ts in cands if ts * bytes_per_row <= budget_bytes]
    if within:
        return max(within)
    return min(cands)   # very large C: smallest legal tile (see C-chunk TODO)


def label_smoothing_cross_entropy(x, target, smoothing=0.1, *,
                                  tile_s=None, tile_bytes=4 << 20):
    """x: (B, C, H, W) float, target: (B, H, W) int -> float32 scalar mean loss.

    Targets are assumed to be in [0, C); out-of-range values silently fall back
    to the smoothing-only term (same as the previous revision).
    """
    assert smoothing < 1.0
    confidence = 1.0 - smoothing
    B, C, H, W = x.shape
    N = H * W
    # TODO(synk): ragged spatial sizes (H*W % 128 != 0) need a masked tail tile.
    assert N % 128 == 0, "H*W must be a multiple of 128 (lane width)"
    S = N // 128

    x4 = x.reshape(B, C, S, 128)
    if x4.dtype != jnp.bfloat16:              # keep bf16 as bf16 (half HBM read)
        x4 = x4.astype(jnp.float32)
    # TODO(synk): targets could be stored as int8 when C <= 127 for even less
    # HBM traffic; int32 kept for lowering robustness.
    t4 = target.reshape(B, S, 128).astype(jnp.int32)

    itemsize = jnp.dtype(x4.dtype).itemsize
    if tile_s is None:
        tile_s = _pick_tile_s(S, C, itemsize, tile_bytes)
    assert S % tile_s == 0

    steps = S // tile_s
    # v7x: if a single batch item can't feed both TensorCores, split the spatial
    # steps into two parallel chunks (neutral on single-TC v5e/v6e).
    n_chunks = 2 if (B == 1 and steps >= 2 and steps % 2 == 0) else 1
    J = steps // n_chunks

    # Generation-aware VMEM accounting (double-buffered inputs + resident out).
    logits_tile = C * tile_s * 128 * itemsize
    tgt_tile = tile_s * 128 * 4
    out_tile = tile_s * 128 * 4
    need = 2 * (logits_tile + tgt_tile + out_tile) + (2 << 20)
    cap = max(_vmem_capacity_bytes(), 48 << 20)
    vmem_limit = min(max(need + (4 << 20), 32 << 20), cap - (8 << 20))
    # TODO(synk): very large C should chunk the class axis (online logsumexp)
    # instead of relying on one (C, tile_s, 128) tile fitting VMEM.
    assert need <= vmem_limit, "logits tile too large for VMEM; chunk the class axis"

    kernel = functools.partial(
        _ls_ce_kernel,
        confidence=float(confidence),
        smooth_over_c=float(smoothing) / float(C),
    )

    partials = pl.pallas_call(
        kernel,
        out_shape=jax.ShapeDtypeStruct((B, n_chunks, tile_s, 128), jnp.float32),
        grid_spec=pltpu.PrefetchScalarGridSpec(
            num_scalar_prefetch=0,
            grid=(B, n_chunks, J),
            in_specs=[
                pl.BlockSpec((1, C, tile_s, 128),
                             lambda i, c, j: (i, 0, c * J + j, 0)),
                pl.BlockSpec((1, tile_s, 128),
                             lambda i, c, j: (i, c * J + j, 0)),
            ],
            out_specs=pl.BlockSpec((1, 1, tile_s, 128),
                                   lambda i, c, j: (i, c, 0, 0)),
        ),
        compiler_params=pltpu.CompilerParams(
            dimension_semantics=("parallel", "parallel", "arbitrary"),
            vmem_limit_bytes=int(vmem_limit)),
    )(x4, t4)

    # Tiny final cross-lane reduction + mean scaling in the wrapper (XLA).
    return jnp.sum(partials) / jnp.float32(B * N)


def _reference(x, target, smoothing=0.1):
    confidence = 1.0 - smoothing
    logprobs = jax.nn.log_softmax(x.astype(jnp.float32), axis=1)   # (B,C,H,W)
    nll = -jnp.take_along_axis(logprobs, target[:, None, :, :], axis=1)[:, 0]
    smooth = -jnp.mean(logprobs, axis=1)
    loss = confidence * nll + smoothing * smooth
    return jnp.mean(loss)


if __name__ == "__main__":
    key = jax.random.PRNGKey(0)
    kx, kt = jax.random.split(key)
    B, C, H, W = 2, 4, 16, 16
    x = jax.random.normal(kx, (B, C, H, W), dtype=jnp.float32)
    target = jax.random.randint(kt, (B, H, W), 0, C, dtype=jnp.int32)

    loss = label_smoothing_cross_entropy(x, target, smoothing=0.1)
    loss = jax.block_until_ready(loss)

    ref = _reference(x, target, smoothing=0.1)
    assert jnp.allclose(loss, ref, atol=1e-5, rtol=1e-5), (loss, ref)
    print("KERNEL_OK")
</pallas_src>

<mosaic_0001>
module attributes {stable_mosaic.version = 11 : i64} {
  func.func @_ls_ce_kernel(%arg0: i32, %arg1: i32, %arg2: i32, %arg3: memref<1x4x2x128xf32, #tpu.memory_space<vmem>>, %arg4: memref<1x2x128xi32, #tpu.memory_space<vmem>>, %arg5: memref<1x1x2x128xf32, #tpu.memory_space<vmem>>) attributes {dimension_semantics = [#tpu.dimension_semantics<parallel>, #tpu.dimension_semantics<parallel>, #tpu.dimension_semantics<arbitrary>], iteration_bounds = array<i64: 2, 1, 1>, scalar_prefetch = 0 : i64, scratch_operands = 0 : i64, tpu.core_type = #tpu.core_type<tc>, window_params = [{transform_indices = @transform_0, window_bounds = array<i64: 1, 4, 2, 128>}, {transform_indices = @transform_1, window_bounds = array<i64: 1, 2, 128>}, {transform_indices = @transform_2, window_bounds = array<i64: 1, 1, 2, 128>}]} {
    %c0_i32 = arith.constant 0 : i32
    %0 = arith.cmpi eq, %arg2, %c0_i32 : i32
    %1 = arith.extui %0 : i1 to i32
    %c0_i32_0 = arith.constant 0 : i32
    %2 = arith.cmpi ne, %1, %c0_i32_0 : i32
    scf.if %2 {
      %cst_21 = arith.constant 0.000000e+00 : f32
      %35 = vector.broadcast %cst_21 : f32 to vector<1x1x2x128xf32>
      %c0_22 = arith.constant 0 : index
      %c0_23 = arith.constant 0 : index
      %c0_24 = arith.constant 0 : index
      %c0_25 = arith.constant 0 : index
      %36 = vector.load %arg5[%c0_22, %c0_23, %c0_24, %c0_25] : memref<1x1x2x128xf32, #tpu.memory_space<vmem>>, vector<1x1x2x128xf32>
      tpu.vector_store %arg5[%c0_22, %c0_23, %c0_24, %c0_25], %35 {strides = array<i32>} : memref<1x1x2x128xf32, #tpu.memory_space<vmem>>, vector<1x1x2x128xf32>,
    } else {
    }
    %c0 = arith.constant 0 : index
    %c0_1 = arith.constant 0 : index
    %c0_2 = arith.constant 0 : index
    %c0_3 = arith.constant 0 : index
    %3 = vector.load %arg3[%c0, %c0_1, %c0_2, %c0_3] : memref<1x4x2x128xf32, #tpu.memory_space<vmem>>, vector<1x4x2x128xf32>
    %4 = vector.shape_cast %3 : vector<1x4x2x128xf32> to vector<4x2x128xf32>
    %c0_4 = arith.constant 0 : index
    %c0_5 = arith.constant 0 : index
    %c0_6 = arith.constant 0 : index
    %5 = vector.load %arg4[%c0_4, %c0_5, %c0_6] : memref<1x2x128xi32, #tpu.memory_space<vmem>>, vector<1x2x128xi32>
    %6 = vector.shape_cast %5 : vector<1x2x128xi32> to vector<2x128xi32>
    %cst = arith.constant dense<0xFF800000> : vector<2x128xf32>
    %7 = vector.multi_reduction <maximumf>, %4, %cst [0] : vector<4x2x128xf32> to vector<2x128xf32>
    %8 = vector.shape_cast %7 : vector<2x128xf32> to vector<1x2x128xf32>
    %9 = vector.broadcast %8 : vector<1x2x128xf32> to vector<4x2x128xf32>
    %10 = arith.subf %4, %9 : vector<4x2x128xf32>
    %11 = math.exp %10 : vector<4x2x128xf32>
    %cst_7 = arith.constant dense<0.000000e+00> : vector<2x128xf32>
    %12 = vector.multi_reduction <add>, %11, %cst_7 [0] : vector<4x2x128xf32> to vector<2x128xf32>
    %13 = math.log %12 : vector<2x128xf32>
    %14 = arith.addf %13, %7 : vector<2x128xf32>
    %cst_8 = arith.constant dense<0.000000e+00> : vector<2x128xf32>
    %15 = vector.multi_reduction <add>, %4, %cst_8 [0] : vector<4x2x128xf32> to vector<2x128xf32>
    %16 = tpu.iota {dimensions = array<i32: 0>} : vector<4x2x128xi32>
    %17 = vector.shape_cast %6 : vector<2x128xi32> to vector<1x2x128xi32>
    %18 = vector.broadcast %17 : vector<1x2x128xi32> to vector<4x2x128xi32>
    %19 = arith.cmpi eq, %16, %18 : vector<4x2x128xi32>
    %cst_9 = arith.constant 0.000000e+00 : f32
    %20 = vector.broadcast %cst_9 : f32 to vector<4x2x128xf32>
    %21 = arith.select %19, %4, %20 : vector<4x2x128xi1>, vector<4x2x128xf32>
    %cst_10 = arith.constant dense<0.000000e+00> : vector<2x128xf32>
    %22 = vector.multi_reduction <add>, %21, %cst_10 [0] : vector<4x2x128xf32> to vector<2x128xf32>
    %c0_11 = arith.constant 0 : index
    %c0_12 = arith.constant 0 : index
    %c0_13 = arith.constant 0 : index
    %c0_14 = arith.constant 0 : index
    %23 = vector.load %arg5[%c0_11, %c0_12, %c0_13, %c0_14] : memref<1x1x2x128xf32, #tpu.memory_space<vmem>>, vector<1x1x2x128xf32>
    %24 = vector.shape_cast %23 : vector<1x1x2x128xf32> to vector<2x128xf32>
    %cst_15 = arith.constant 0.899999976 : f32
    %25 = vector.broadcast %cst_15 : f32 to vector<2x128xf32>
    %26 = arith.mulf %25, %22 : vector<2x128xf32>
    %27 = arith.subf %14, %26 : vector<2x128xf32>
    %cst_16 = arith.constant 2.500000e-02 : f32
    %28 = vector.broadcast %cst_16 : f32 to vector<2x128xf32>
    %29 = arith.mulf %28, %15 : vector<2x128xf32>
    %30 = arith.subf %27, %29 : vector<2x128xf32>
    %31 = arith.addf %24, %30 : vector<2x128xf32>
    %c0_17 = arith.constant 0 : index
    %c0_18 = arith.constant 0 : index
    %c0_19 = arith.constant 0 : index
    %c0_20 = arith.constant 0 : index
    %32 = vector.load %arg5[%c0_17, %c0_18, %c0_19, %c0_20] : memref<1x1x2x128xf32, #tpu.memory_space<vmem>>, vector<1x1x2x128xf32>
    %33 = vector.shape_cast %32 : vector<1x1x2x128xf32> to vector<2x128xf32>
    %34 = vector.shape_cast %31 : vector<2x128xf32> to vector<1x1x2x128xf32>
    tpu.vector_store %arg5[%c0_17, %c0_18, %c0_19, %c0_20], %34 {strides = array<i32>} : memref<1x1x2x128xf32, #tpu.memory_space<vmem>>, vector<1x1x2x128xf32>,
    return
  }
  func.func @transform_0(%arg0: i32, %arg1: i32, %arg2: i32) -> (i32, i32, i32, i32) {
    %c1_i32 = arith.constant 1 : i32
    %0 = arith.muli %arg1, %c1_i32 : i32
    %1 = arith.addi %0, %arg2 : i32
    %c0_i32 = arith.constant 0 : i32
    %c0_i32_0 = arith.constant 0 : i32
    %c0_i32_1 = arith.constant 0 : i32
    return %arg0, %c0_i32, %1, %c0_i32_0 : i32, i32, i32, i32
  }
  func.func @transform_1(%arg0: i32, %arg1: i32, %arg2: i32) -> (i32, i32, i32) {
    %c1_i32 = arith.constant 1 : i32
    %0 = arith.muli %arg1, %c1_i32 : i32
    %1 = arith.addi %0, %arg2 : i32
    %c0_i32 = arith.constant 0 : i32
    %c0_i32_0 = arith.constant 0 : i32
    return %arg0, %1, %c0_i32 : i32, i32, i32
  }
  func.func @transform_2(%arg0: i32, %arg1: i32, %arg2: i32) -> (i32, i32, i32, i32) {
    %c0_i32 = arith.constant 0 : i32
    %c0_i32_0 = arith.constant 0 : i32
    %c0_i32_1 = arith.constant 0 : i32
    return %arg0, %arg1, %c0_i32, %c0_i32_0 : i32, i32, i32, i32
  }
}

</mosaic_0001>

<llo_original>
// kernel: tpu_custom_call.1
$region0: #{tpu_custom_call.1}
  #allocation0 [shape = 'u32[]', space=smem, size = 0x4, offset = 0x4, fixed_abs, tag = 'smem constant byte address 0x4 - core index']
  #allocation1 [shape = 'u32[144,128]{1,0:T(1,128)}', space=vmem, size = 0x12000, scoped, tag = 'internal scratch']
  %s0 = inlined_call_operand.hbm [shape: f32[2,4,2,128], index: 0, kind: input, shape index: {}]
  %s1 = inlined_call_operand.hbm [shape: s32[2,2,128], index: 1, kind: input, shape index: {}]
  %s2 = inlined_call_operand.hbm [shape: f32[2,1,2,128], index: 2, kind: output, shape index: {}]
  %s3 = sld [smem:[#allocation0]]
  $region53: #{tpu_custom_call.1} parent=0
    _
  %s5 = ssub.s32 1, %s3
  %s6 = scalar_select 0, %s5, %s3
  $region1: #{tpu_custom_call.1} parent=0
    #allocation2 [shape = 'u8[8192]{0}', space=vmem, size = 0x2000, scoped, tag = 'input window, operand 0']
    #allocation3 [shape = 's32[2]{0}', space=sflag, size = 0x8, scoped, tag = 'scoped memory for tpu_custom_call.1']
    #allocation4 [shape = 's32[2]{0}', space=sflag, size = 0x8, scoped, tag = 'scoped memory for tpu_custom_call.1']
    #allocation5 [shape = 'u8[2048]{0}', space=vmem, size = 0x800, scoped, tag = 'input window, operand 1']
    #allocation6 [shape = 's32[2]{0}', space=sflag, size = 0x8, scoped, tag = 'scoped memory for tpu_custom_call.1']
    #allocation7 [shape = 'u8[2048]{0}', space=vmem, size = 0x800, scoped, tag = 'output window, operand 0']
    %7 = vsyncpa [#allocation3], 0
    %s8 = scalar_lea.sflag [#allocation3], 1
    %9 = vsyncpa %s8, 0
    %10 = vsyncpa [#allocation6], 0
    %s11 = scalar_lea.sflag [#allocation6], 1
    %12 = vsyncpa %s11, 0
    %13 = vsyncpa [#allocation4], 0
    %s14 = scalar_lea.sflag [#allocation4], 1
    %15 = vsyncpa %s14, 0
    loop: start=0, step=1, limit=4
    $region2: #{tpu_custom_call.1} parent=1 // loop_pre_header
      _
    $region3: #{tpu_custom_call.1} parent=1 // loop_header
      %s17 = sphi 0, %s21
      %p18 = scmp.ge.s32.totalorder %s17, 4
      %s24 = sphi 0, %s43
      %s25 = sphi 0, %s39
      %s26 = sphi 0, %s35
      %s27 = sphi 0, %s24
      %s28 = sphi 0, %s25
      %s29 = sphi 0, %s26
      %s30 = sphi 0, %s27
      %s31 = sphi 0, %s28
      %s32 = sphi 0, %s29
      %s50 = sphi 0, %s52
      %s53 = sphi 0, %s50
      %s54 = sphi 0, %s53
      %s70 = sphi 0, %s54
      %s80 = sphi 0, %s82
      %s83 = sphi 0, %s80
      %s84 = sphi 0, %s83
      %s100 = sphi 0, %s84
      %s108 = sphi 0, %s110
      %s111 = sphi 0, %s108
      %s112 = sphi 0, %s111
      %s128 = sphi 0, %s112
    $region4: #{tpu_custom_call.1} parent=1 // loop_header_branch
      %20 = sbr.rel (%p18) target = $region8
    $region5: #{tpu_custom_call.1} parent=1 // loop_body
      %s22 = ssub.s32 %s17, 1
      %s23 = ssub.s32 %s17, 2
      %s33 = sadd.s32 1, %s26
      %p34 = scmp.ge.s32.totalorder %s33, 1
      %s35 = scalar_select %p34, 0, %s33
      %s36 = sadd.s32 1, %s25
      %s37 = scalar_select %p34, %s36, %s25
      %p38 = scmp.ge.s32.totalorder %s37, 1
      %s39 = scalar_select %p38, 0, %s37
      %s40 = sadd.s32 1, %s24
      %s41 = scalar_select %p38, %s40, %s24
      %p42 = scmp.ge.s32.totalorder %s41, 2
      %s43 = scalar_select %p42, 0, %s41
      %s44 = sadd.s32 %s25, %s26
      %s45 = sadd.s32 %s39, %s35
      %s46 = ssub.s32 %s24, %s43
      %s47 = ssub.s32 %s44, %s45
      %s48 = sor.u32 %s46, %s47
      %p49 = scmp.eq.s32.totalorder %s48, 0
      %s51 = sadd.s32 %s50, 1
      %s52 = scalar_select %p49, %s50, %s51
      %p55 = pneg %p49
      %p56 = scmp.eq.s32.totalorder %s17, 1
      %p57 = por %p55, %p56
      %p58 = scmp.ne.s32.totalorder %s50, %s53
      %p59 = scmp.eq.s32.totalorder %s17, 0
      %p60 = por %p58, %p59
      %p61 = scmp.ne.s32.totalorder %s50, %s53
      %p62 = scmp.eq.s32.totalorder %s22, 1
      %p63 = por %p61, %p62
      %p64 = scmp.ne.s32.totalorder %s53, %s54
      %p65 = scmp.eq.s32.totalorder %s22, 0
      %p66 = por %p64, %p65
      %p67 = scmp.ne.s32.totalorder %s53, %s54
      %p68 = scmp.eq.s32.totalorder %s23, 1
      %p69 = por %p67, %p68
      %p71 = scmp.ne.s32.totalorder %s54, %s70
      %p72 = scmp.eq.s32.totalorder %s23, 0
      %p73 = por %p71, %p72
      %s74 = sadd.s32 %s25, %s26
      %s75 = sadd.s32 %s39, %s35
      %s76 = ssub.s32 %s24, %s43
      %s77 = ssub.s32 %s74, %s75
      %s78 = sor.u32 %s76, %s77
      %p79 = scmp.eq.s32.totalorder %s78, 0
      %s81 = sadd.s32 %s80, 1
      %s82 = scalar_select %p79, %s80, %s81
      %p85 = pneg %p79
      %p86 = scmp.eq.s32.totalorder %s17, 1
      %p87 = por %p85, %p86
      %p88 = scmp.ne.s32.totalorder %s80, %s83
      %p89 = scmp.eq.s32.totalorder %s17, 0
      %p90 = por %p88, %p89
      %p91 = scmp.ne.s32.totalorder %s80, %s83
      %p92 = scmp.eq.s32.totalorder %s22, 1
      %p93 = por %p91, %p92
      %p94 = scmp.ne.s32.totalorder %s83, %s84
      %p95 = scmp.eq.s32.totalorder %s22, 0
      %p96 = por %p94, %p95
      %p97 = scmp.ne.s32.totalorder %s83, %s84
      %p98 = scmp.eq.s32.totalorder %s23, 1
      %p99 = por %p97, %p98
      %p101 = scmp.ne.s32.totalorder %s84, %s100
      %p102 = scmp.eq.s32.totalorder %s23, 0
      %p103 = por %p101, %p102
      %s104 = ssub.s32 %s24, %s43
      %s105 = ssub.s32 %s25, %s39
      %s106 = sor.u32 %s104, %s105
      %p107 = scmp.eq.s32.totalorder %s106, 0
      %s109 = sadd.s32 %s108, 1
      %s110 = scalar_select %p107, %s108, %s109
      %p113 = pneg %p107
      %p114 = scmp.eq.s32.totalorder %s17, 1
      %p115 = por %p113, %p114
      %p116 = scmp.ne.s32.totalorder %s108, %s111
      %p117 = scmp.eq.s32.totalorder %s17, 0
      %p118 = por %p116, %p117
      %p119 = scmp.ne.s32.totalorder %s108, %s111
      %p120 = scmp.eq.s32.totalorder %s22, 1
      %p121 = por %p119, %p120
      %p122 = scmp.ne.s32.totalorder %s111, %s112
      %p123 = scmp.eq.s32.totalorder %s22, 0
      %p124 = por %p122, %p123
      %p125 = scmp.ne.s32.totalorder %s111, %s112
      %p126 = scmp.eq.s32.totalorder %s23, 1
      %p127 = por %p125, %p126
      %p129 = scmp.ne.s32.totalorder %s112, %s128
      %p130 = scmp.eq.s32.totalorder %s23, 0
      %p131 = por %p129, %p130
      %p132 = scmp.le.s32.totalorder 1, %s17
      %p133 = scmp.lt.s32.totalorder %s17, 3
      %p134 = pnand %p132, %p133
      %p135 = pneg %p134
      // Predicated region
      $region9: #{tpu_custom_call.1} parent=5 // pred_check
        _
      $region10: #{tpu_custom_call.1} parent=5 // pred_check_branch
        %137 = sbr.rel (%p134) target = $region12
      $region11: #{tpu_custom_call.1} parent=5 // pred_region
        %s138 = ssub.s32 %s17, 1
      $region12: #{tpu_custom_call.1} parent=5 // pred_fallthru
        _
      %p139 = scmp.lt.s32.totalorder %s17, 2
      // Predicated region
      $region13: #{tpu_custom_call.1} parent=5 // pred_check
        %p140 = pneg %p139
      $region14: #{tpu_custom_call.1} parent=5 // pred_check_branch
        %142 = sbr.rel (%p140) target = $region16
      $region15: #{tpu_custom_call.1} parent=5 // pred_region
        // Predicated region
        $region17: #{tpu_custom_call.1} parent=15 // pred_check
          %p143 = pneg %p60
        $region18: #{tpu_custom_call.1} parent=15 // pred_check_branch
          %145 = sbr.rel (%p143) target = $region20
        $region19: #{tpu_custom_call.1} parent=15 // pred_region
          %s146 = sand.u32 %s50, 1
          %s147 = scalar_lea.sflag [#allocation3], %s146
          %s148 = sand.u32 %s50, 1
          %s149 = smul.addr %s148, 8
          %s150 = scalar_lea.vmem [#allocation2], %s149
          %s151 = sadd.s32 %s25, %s26
          %s153 = ssub.s32 128, 128
          %154 = vsyncadd %s147, %s153
          %s155 = smul.addr %s24, 4
          %s156 = sadd.s32 %s151, %s155
          %s157 = smul.addr %s156, 32
          %s158 = scalar_lea.hbm %s0, %s157
          %s159 = sshll.u32 %s150, 4
          %s160 = int_to_ptr.vmem [resolvable:$true] %s159
          %165 = dma.hbm_to_vmem [thread:$0]  %s158, 128, %s160, %s147, 32, 32, 2
        $region20: #{tpu_custom_call.1} parent=15 // pred_fallthru
          _
        // Predicated region
        $region21: #{tpu_custom_call.1} parent=15 // pred_check
          %p166 = pneg %p90
        $region22: #{tpu_custom_call.1} parent=15 // pred_check_branch
          %168 = sbr.rel (%p166) target = $region24
        $region23: #{tpu_custom_call.1} parent=15 // pred_region
          %s169 = sand.u32 %s80, 1
          %s170 = scalar_lea.sflag [#allocation6], %s169
          %s171 = sand.u32 %s80, 1
          %s172 = smul.addr %s171, 2
          %s173 = scalar_lea.vmem [#allocation5], %s172
          %s174 = sadd.s32 %s25, %s26
          %s176 = ssub.s32 32, 32
          %177 = vsyncadd %s170, %s176
          %s178 = sadd.s32 %s174, %s24
          %s179 = smul.addr %s178, 32
          %s180 = scalar_lea.hbm %s1, %s179
          %s182 = sshll.u32 %s173, 4
          %s183 = int_to_ptr.vmem [resolvable:$true] %s182
          %185 = dma.hbm_to_vmem [thread:$0]  %s180, 32, %s183, %s170
        $region24: #{tpu_custom_call.1} parent=15 // pred_fallthru
          _
      $region16: #{tpu_custom_call.1} parent=5 // pred_fallthru
        _
      %p186 = scmp.le.s32.totalorder 1, %s17
      %p187 = scmp.lt.s32.totalorder %s17, 3
      %p188 = pnand %p186, %p187
      %p189 = pneg %p188
      // Predicated region
      $region25: #{tpu_custom_call.1} parent=5 // pred_check
        _
      $region26: #{tpu_custom_call.1} parent=5 // pred_check_branch
        %191 = sbr.rel (%p188) target = $region28
      $region27: #{tpu_custom_call.1} parent=5 // pred_region
        %s192 = ssub.s32 %s17, 1
        %s193 = sand.u32 %s53, 1
        %s194 = scalar_lea.sflag [#allocation3], %s193
        %s195 = sand.u32 %s53, 1
        %s196 = smul.addr %s195, 8
        %s197 = scalar_lea.vmem [#allocation2], %s196
        // Predicated region
        $region29: #{tpu_custom_call.1} parent=27 // pred_check
          %p198 = pneg %p66
        $region30: #{tpu_custom_call.1} parent=27 // pred_check_branch
          %200 = sbr.rel (%p198) target = $region32
        $region31: #{tpu_custom_call.1} parent=27 // pred_region
          %201 = dma.done %s194, 128
        $region32: #{tpu_custom_call.1} parent=27 // pred_fallthru
          _
        %s202 = sand.u32 %s83, 1
        %s203 = scalar_lea.sflag [#allocation6], %s202
        %s204 = sand.u32 %s83, 1
        %s205 = smul.addr %s204, 2
        %s206 = scalar_lea.vmem [#allocation5], %s205
        // Predicated region
        $region33: #{tpu_custom_call.1} parent=27 // pred_check
          %p207 = pneg %p96
        $region34: #{tpu_custom_call.1} parent=27 // pred_check_branch
          %209 = sbr.rel (%p207) target = $region36
        $region35: #{tpu_custom_call.1} parent=27 // pred_region
          %210 = dma.done %s203, 32
        $region36: #{tpu_custom_call.1} parent=27 // pred_fallthru
          _
        %s211 = sand.u32 %s53, 1
        %s212 = scalar_lea.sflag [#allocation3], %s211
        %s213 = sand.u32 %s53, 1
        %s214 = smul.addr %s213, 8
        %s215 = scalar_lea.vmem [#allocation2], %s214
        %p216 = pneg %p66
        %p217 = pneg %p63
        %s218 = sand.u32 %s83, 1
        %s219 = scalar_lea.sflag [#allocation6], %s218
        %s220 = sand.u32 %s83, 1
        %s221 = smul.addr %s220, 2
        %s222 = scalar_lea.vmem [#allocation5], %s221
        %p223 = pneg %p96
        %p224 = pneg %p93
        %p225 = pneg %p124
        %p226 = pneg %p121
        %s227 = sand.u32 %s111, 1
        %s228 = scalar_lea.sflag [#allocation4], %s227
        %s229 = sand.u32 %s111, 1
        %s230 = smul.addr %s229, 2
        %s231 = scalar_lea.vmem [#allocation7], %s230
        %s232 = sadd.s32 %s28, %s29
        %s233 = sadd.s32 %s28, %s29
        %p234 = scmp.eq.s32.totalorder %s29, 0
        // Predicated region
        $region37: #{tpu_custom_call.1} parent=27 // pred_check
          %p235 = pneg %p234
        $region38: #{tpu_custom_call.1} parent=27 // pred_check_branch
          %237 = sbr.rel (%p235) target = $region40
        $region39: #{tpu_custom_call.1} parent=27 // pred_region
          %238 = vst [vmem:[%s231] sm:$0x3] 0.0
        $region40: #{tpu_custom_call.1} parent=27 // pred_fallthru
          _
        %v239 = vld [vmem:[%s197] sm:$0x3]
        %v240 = vld [vmem:[%s197 + $0x2] sm:$0x3]
        %v241 = vld [vmem:[%s197 + $0x4] sm:$0x3]
        %v242 = vld [vmem:[%s197 + $0x6] sm:$0x3]
        %v243 = vld [vmem:[%s206] sm:$0x3]
        %vm244 = vcmask 1041408
        %v245 = vsel %vm244, %v239, -inf
        %v246 = vsel %vm244, %v240, -inf
        %v247 = vsel %vm244, %v241, -inf
        %v248 = vsel %vm244, %v242, -inf
        %v249 = vmax.f32 %v245, %v246
        %v250 = vmax.f32 %v247, %v248
        %v251 = vmax.f32 %v249, %v250
        %v252 = vsub.f32 %v239, %v251
        %v253 = vsub.f32 %v240, %v251
        %v254 = vsub.f32 %v241, %v251
        %v255 = vsub.f32 %v242, %v251
        %v256 = vmul.f32 %v252, 1.442695
        %v257 = vpow.pop %v256
        %v258 = vmul.f32 %v253, 1.442695
        %v259 = vpow.pop %v258
        %v260 = vmul.f32 %v254, 1.442695
        %v261 = vpow.pop %v260
        %v262 = vmul.f32 %v255, 1.442695
        %v263 = vpow.pop %v262
        %v264 = vsel %vm244, %v257, 0.0
        %v265 = vsel %vm244, %v259, 0.0
        %v266 = vadd.f32 %v264, %v265
        %v267 = vsel %vm244, %v261, 0.0
        %v268 = vadd.f32 %v266, %v267
        %v269 = vsel %vm244, %v263, 0.0
        %v270 = vadd.f32 %v268, %v269
        %v271 = vlog2.pop %v270
        %v272 = vmul.f32 %v271, 0.6931472
        %v273 = vadd.f32 %v272, %v251
        %v274 = vsel %vm244, %v239, 0.0
        %v275 = vsel %vm244, %v240, 0.0
        %v276 = vadd.f32 %v274, %v275
        %v277 = vsel %vm244, %v241, 0.0
        %v278 = vadd.f32 %v276, %v277
        %v279 = vsel %vm244, %v242, 0.0
        %v280 = vadd.f32 %v278, %v279
        %vm281 = vcmp.eq.s32.totalorder %v243, 0
        %vm282 = vcmp.eq.s32.totalorder %v243, 1
        %vm283 = vcmp.eq.s32.totalorder %v243, 2
        %vm284 = vcmp.eq.s32.totalorder %v243, 3
        %v285 = vsel %vm281, %v239, 0.0
        %v286 = vsel %vm282, %v240, 0.0
        %v287 = vsel %vm283, %v241, 0.0
        %v288 = vsel %vm284, %v242, 0.0
        %v289 = vsel %vm244, %v285, 0.0
        %v290 = vsel %vm244, %v286, 0.0
        %v291 = vadd.f32 %v289, %v290
        %v292 = vsel %vm244, %v287, 0.0
        %v293 = vadd.f32 %v291, %v292
        %v294 = vsel %vm244, %v288, 0.0
        %v295 = vadd.f32 %v293, %v294
        %v296 = vld [vmem:[%s231] sm:$0x3]
        %v297 = vmul.f32 %v295, 0.9
        %v298 = vsub.f32 %v273, %v297
        %v299 = vmul.f32 %v280, 0.025
        %v300 = vsub.f32 %v298, %v299
        %v301 = vadd.f32 %v296, %v300
        %302 = vst [vmem:[%s231] sm:$0x3] %v301
        %s303 = sand.u32 %s111, 1
        %s304 = scalar_lea.sflag [#allocation4], %s303
        %s305 = sand.u32 %s111, 1
        %s306 = smul.addr %s305, 2
        %s307 = scalar_lea.vmem [#allocation7], %s306
        // Predicated region
        $region41: #{tpu_custom_call.1} parent=27 // pred_check
          %p308 = pneg %p121
        $region42: #{tpu_custom_call.1} parent=27 // pred_check_branch
          %310 = sbr.rel (%p308) target = $region44
        $region43: #{tpu_custom_call.1} parent=27 // pred_region
          %s312 = ssub.s32 32, 32
          %313 = vsyncadd %s304, %s312
          %s314 = sadd.s32 %s28, %s27
          %s315 = smul.addr %s314, 32
          %s316 = scalar_lea.hbm %s2, %s315
          %s318 = sshll.u32 %s307, 4
          %s319 = int_to_ptr.vmem [resolvable:$true] %s318
          %321 = dma.vmem_to_hbm [thread:$0]  %s319, 32, %s316, %s304
        $region44: #{tpu_custom_call.1} parent=27 // pred_fallthru
          _
      $region28: #{tpu_custom_call.1} parent=5 // pred_fallthru
        _
      %p322 = scmp.le.s32.totalorder 2, %s17
      // Predicated region
      $region45: #{tpu_custom_call.1} parent=5 // pred_check
        %p323 = pneg %p322
      $region46: #{tpu_custom_call.1} parent=5 // pred_check_branch
        %325 = sbr.rel (%p323) target = $region48
      $region47: #{tpu_custom_call.1} parent=5 // pred_region
        %s326 = ssub.s32 %s17, 2
        // Predicated region
        $region49: #{tpu_custom_call.1} parent=47 // pred_check
          %p327 = pneg %p127
        $region50: #{tpu_custom_call.1} parent=47 // pred_check_branch
          %329 = sbr.rel (%p327) target = $region52
        $region51: #{tpu_custom_call.1} parent=47 // pred_region
          %s330 = sand.u32 %s112, 1
          %s331 = scalar_lea.sflag [#allocation4], %s330
          %s332 = sand.u32 %s112, 1
          %s333 = smul.addr %s332, 2
          %s334 = scalar_lea.vmem [#allocation7], %s333
          %335 = dma.done %s331, 32
        $region52: #{tpu_custom_call.1} parent=47 // pred_fallthru
          _
      $region48: #{tpu_custom_call.1} parent=5 // pred_fallthru
        _
    $region6: #{tpu_custom_call.1} parent=1 // loop_footer
      %s21 = sadd.s32 1, %s17
    $region7: #{tpu_custom_call.1} parent=1 // loop_footer_branch
      %16 = sbr.rel target = $region3
    $region8: #{tpu_custom_call.1} parent=1 // loop_exit
      _
    %336 = vsyncpa [#allocation3], 1
    %s337 = scalar_lea.sflag [#allocation3], 1
    %338 = vsyncpa %s337, 1
    %339 = vsyncpa [#allocation6], 1
    %s340 = scalar_lea.sflag [#allocation6], 1
    %341 = vsyncpa %s340, 1
    %342 = vsyncpa [#allocation4], 1
    %s343 = scalar_lea.sflag [#allocation4], 1
    %344 = vsyncpa %s343, 1

</llo_original>
